<compile_context>
chip_gen: v5e
topology: v5e:2x2
jax: 0.10.0
libtpu: 0.0.40
codegen_flags: <defaults>
</compile_context>

<pallas_src>
import functools

import jax
import jax.numpy as jnp
from jax.experimental import pallas as pl
from jax.experimental.pallas import tpu as pltpu


def _round_up(a: int, b: int) -> int:
    return ((a + b - 1) // b) * b


def _content_loss_kernel(x_ref, t_ref, partial_ref, acc_ref, *, weight):
    """Grid = (core, step).  Accumulate sum((x*w - t)^2) for this core's slice.

    x_ref       : VMEM (tile_rows, lanes)  input tile
    t_ref       : VMEM (tile_rows, lanes)  pre-scaled target tile (target * weight)
    partial_ref : VMEM (8, lanes)          per-core partial-sum output block
    acc_ref     : VMEM (8, lanes) f32      scratch accumulator (per core)
    """
    s = pl.program_id(1)

    @pl.when(s == 0)
    def _():
        acc_ref[...] = jnp.zeros_like(acc_ref)

    diff = x_ref[...].astype(jnp.float32) * weight - t_ref[...].astype(jnp.float32)
    sq = diff * diff
    # Fold tile rows in groups of 8 sublanes: pure vreg-wise VPU adds (no XLU per step).
    acc_ref[...] += jnp.sum(sq.reshape(-1, 8, sq.shape[-1]), axis=0)

    @pl.when(s == pl.num_programs(1) - 1)
    def _():
        partial_ref[...] = acc_ref[...]


def content_loss_forward(x, target_scaled, weight, *,
                         lanes=512, max_tile_rows=1024, num_parallel=2):
    """Returns (output, loss):
       output == x (ContentLoss.forward returns its input unchanged)
       loss   == mean((x * weight - target_scaled)^2)   (nn.MSELoss default 'mean')
    """
    n = x.size
    xf = jnp.ravel(x)
    tf = jnp.ravel(target_scaled)

    # Tile geometry: rows of `lanes` elements, tiles of tile_rows rows (multiple of 8).
    rows_needed = pl.cdiv(n, lanes)
    tile_rows = min(_round_up(max_tile_rows, 8), _round_up(rows_needed, 8))
    chunk_rows = num_parallel * tile_rows
    padded_rows = _round_up(rows_needed, chunk_rows)
    steps = padded_rows // chunk_rows
    padded_n = padded_rows * lanes

    if padded_n != n:
        # Zero padding on both operands: padded diff = 0*w - 0 = 0, so SSE is unchanged.
        xf = jnp.pad(xf, (0, padded_n - n))
        tf = jnp.pad(tf, (0, padded_n - n))

    x2 = xf.reshape(padded_rows, lanes)
    t2 = tf.reshape(padded_rows, lanes)

    kernel = functools.partial(_content_loss_kernel, weight=float(weight))

    partials = pl.pallas_call(
        kernel,
        out_shape=jax.ShapeDtypeStruct((num_parallel * 8, lanes), jnp.float32),
        grid=(num_parallel, steps),
        in_specs=[
            pl.BlockSpec((tile_rows, lanes), lambda c, s: (c * steps + s, 0)),
            pl.BlockSpec((tile_rows, lanes), lambda c, s: (c * steps + s, 0)),
        ],
        # Per-core partial block; constant across the (arbitrary) reduction axis.
        out_specs=pl.BlockSpec((8, lanes), lambda c, s: (c, 0)),
        scratch_shapes=[pltpu.VMEM((8, lanes), jnp.float32)],
        compiler_params=pltpu.CompilerParams(
            # Leading axis sharded across TensorCores on v7x; reduction axis sequential.
            dimension_semantics=("parallel", "arbitrary"),
        ),
    )(x2, t2)

    loss = jnp.sum(partials) / jnp.float32(n)
    # forward() returns its input unchanged -> no kernel write needed for it.
    return x, loss

# TODO(synk): ContentLoss.backward (autograd hook) has no Pallas-forward equivalent here;
#             use jax.grad over content_loss_forward's loss if gradients are needed.


if __name__ == "__main__":
    key = jax.random.PRNGKey(0)
    k1, k2, k3, k4 = jax.random.split(key, 4)

    # Small conv-feature-map-like shapes (NCHW): batch=2, channels=4, 16x16 spatial.
    shape = (2, 4, 16, 16)
    weight = 0.75

    x = jax.random.normal(k1, shape, dtype=jnp.float32)           # "input" features
    target_raw = jax.random.normal(k2, shape, dtype=jnp.float32)  # "target" features

    # __init__ glue: target.detach() * weight
    target_scaled = target_raw * weight

    out, loss = content_loss_forward(x, target_scaled, weight)
    out = jax.block_until_ready(out)
    loss = jax.block_until_ready(loss)

    # Reference check (plain JAX)
    ref_loss = jnp.mean((x * weight - target_scaled) ** 2)
    assert jnp.allclose(out, x), "pass-through output mismatch"
    assert jnp.allclose(loss, ref_loss, rtol=1e-6, atol=1e-6), (loss, ref_loss)

    # Second check: a shape that does NOT tile exactly (exercises the padded tail path).
    shape2 = (2, 3, 15, 13)
    x2 = jax.random.normal(k3, shape2, dtype=jnp.float32)
    t2 = jax.random.normal(k4, shape2, dtype=jnp.float32) * weight
    out2, loss2 = content_loss_forward(x2, t2, weight)
    loss2 = jax.block_until_ready(loss2)
    ref_loss2 = jnp.mean((x2 * weight - t2) ** 2)
    assert jnp.allclose(loss2, ref_loss2, rtol=1e-6, atol=1e-6), (loss2, ref_loss2)

    print("KERNEL_OK")
</pallas_src>

<mosaic_0001>
module attributes {stable_mosaic.version = 11 : i64} {
  func.func @_content_loss_kernel(%arg0: i32, %arg1: i32, %arg2: memref<8x512xf32, #tpu.memory_space<vmem>>, %arg3: memref<8x512xf32, #tpu.memory_space<vmem>>, %arg4: memref<8x512xf32, #tpu.memory_space<vmem>>, %arg5: memref<8x512xf32, #tpu.memory_space<vmem>>) attributes {dimension_semantics = [#tpu.dimension_semantics<parallel>, #tpu.dimension_semantics<arbitrary>], iteration_bounds = array<i64: 2, 1>, scalar_prefetch = 0 : i64, scratch_operands = 1 : i64, tpu.core_type = #tpu.core_type<tc>, window_params = [{transform_indices = @transform_0, window_bounds = array<i64: 8, 512>}, {transform_indices = @transform_1, window_bounds = array<i64: 8, 512>}, {transform_indices = @transform_2, window_bounds = array<i64: 8, 512>}]} {
    %c0_i32 = arith.constant 0 : i32
    %0 = arith.cmpi eq, %arg1, %c0_i32 : i32
    %1 = arith.extui %0 : i1 to i32
    %c0_i32_0 = arith.constant 0 : i32
    %2 = arith.cmpi ne, %1, %c0_i32_0 : i32
    scf.if %2 {
      %cst_11 = arith.constant 0.000000e+00 : f32
      %17 = vector.broadcast %cst_11 : f32 to vector<8x512xf32>
      %c0_12 = arith.constant 0 : index
      %c0_13 = arith.constant 0 : index
      %18 = vector.load %arg5[%c0_12, %c0_13] : memref<8x512xf32, #tpu.memory_space<vmem>>, vector<8x512xf32>
      tpu.vector_store %arg5[%c0_12, %c0_13], %17 {strides = array<i32>} : memref<8x512xf32, #tpu.memory_space<vmem>>, vector<8x512xf32>,
    } else {
    }
    %c0 = arith.constant 0 : index
    %c0_1 = arith.constant 0 : index
    %3 = vector.load %arg2[%c0, %c0_1] : memref<8x512xf32, #tpu.memory_space<vmem>>, vector<8x512xf32>
    %cst = arith.constant 7.500000e-01 : f32
    %4 = vector.broadcast %cst : f32 to vector<8x512xf32>
    %5 = arith.mulf %3, %4 : vector<8x512xf32>
    %c0_2 = arith.constant 0 : index
    %c0_3 = arith.constant 0 : index
    %6 = vector.load %arg3[%c0_2, %c0_3] : memref<8x512xf32, #tpu.memory_space<vmem>>, vector<8x512xf32>
    %7 = arith.subf %5, %6 : vector<8x512xf32>
    %8 = arith.mulf %7, %7 : vector<8x512xf32>
    %c0_4 = arith.constant 0 : index
    %c0_5 = arith.constant 0 : index
    %9 = vector.load %arg5[%c0_4, %c0_5] : memref<8x512xf32, #tpu.memory_space<vmem>>, vector<8x512xf32>
    %10 = vector.shape_cast %8 : vector<8x512xf32> to vector<1x8x512xf32>
    %cst_6 = arith.constant dense<0.000000e+00> : vector<8x512xf32>
    %11 = vector.multi_reduction <add>, %10, %cst_6 [0] : vector<1x8x512xf32> to vector<8x512xf32>
    %12 = arith.addf %9, %11 : vector<8x512xf32>
    %c0_7 = arith.constant 0 : index
    %c0_8 = arith.constant 0 : index
    %13 = vector.load %arg5[%c0_7, %c0_8] : memref<8x512xf32, #tpu.memory_space<vmem>>, vector<8x512xf32>
    tpu.vector_store %arg5[%c0_7, %c0_8], %12 {strides = array<i32>} : memref<8x512xf32, #tpu.memory_space<vmem>>, vector<8x512xf32>,
    %c0_i32_9 = arith.constant 0 : i32
    %14 = arith.cmpi eq, %arg1, %c0_i32_9 : i32
    %15 = arith.extui %14 : i1 to i32
    %c0_i32_10 = arith.constant 0 : i32
    %16 = arith.cmpi ne, %15, %c0_i32_10 : i32
    scf.if %16 {
      %c0_11 = arith.constant 0 : index
      %c0_12 = arith.constant 0 : index
      %17 = vector.load %arg5[%c0_11, %c0_12] : memref<8x512xf32, #tpu.memory_space<vmem>>, vector<8x512xf32>
      %c0_13 = arith.constant 0 : index
      %c0_14 = arith.constant 0 : index
      %18 = vector.load %arg4[%c0_13, %c0_14] : memref<8x512xf32, #tpu.memory_space<vmem>>, vector<8x512xf32>
      tpu.vector_store %arg4[%c0_13, %c0_14], %17 {strides = array<i32>} : memref<8x512xf32, #tpu.memory_space<vmem>>, vector<8x512xf32>,
    } else {
    }
    return
  }
  func.func @transform_0(%arg0: i32, %arg1: i32) -> (i32, i32) {
    %c1_i32 = arith.constant 1 : i32
    %0 = arith.muli %arg0, %c1_i32 : i32
    %1 = arith.addi %0, %arg1 : i32
    %c0_i32 = arith.constant 0 : i32
    %c0_i32_0 = arith.constant 0 : i32
    return %1, %c0_i32 : i32, i32
  }
  func.func @transform_1(%arg0: i32, %arg1: i32) -> (i32, i32) {
    %c1_i32 = arith.constant 1 : i32
    %0 = arith.muli %arg0, %c1_i32 : i32
    %1 = arith.addi %0, %arg1 : i32
    %c0_i32 = arith.constant 0 : i32
    %c0_i32_0 = arith.constant 0 : i32
    return %1, %c0_i32 : i32, i32
  }
  func.func @transform_2(%arg0: i32, %arg1: i32) -> (i32, i32) {
    %c0_i32 = arith.constant 0 : i32
    %c0_i32_0 = arith.constant 0 : i32
    return %arg0, %c0_i32 : i32, i32
  }
}

</mosaic_0001>

<llo_original>
// kernel: tpu_custom_call.1
$region0: #{tpu_custom_call.1}
  #allocation0 [shape = 'u32[]', space=smem, size = 0x4, offset = 0x4, fixed_abs, tag = 'smem constant byte address 0x4 - core index']
  #allocation1 [shape = 'u32[72,128]{1,0:T(1,128)}', space=vmem, size = 0x9000, scoped, tag = 'internal scratch']
  #allocation2 [shape = 'f32[8,512]{1,0:T(8,128)}', space=vmem, size = 0x4000, scoped, tag = 'scratch operand']
  %s0 = inlined_call_operand.hbm [shape: f32[16,512], index: 0, kind: input, shape index: {}]
  %s1 = inlined_call_operand.hbm [shape: f32[16,512], index: 1, kind: input, shape index: {}]
  %s2 = inlined_call_operand.hbm [shape: f32[16,512], index: 2, kind: output, shape index: {}]
  %s3 = sld [smem:[#allocation0]]
  $region57: #{tpu_custom_call.1} parent=0
    _
  %s5 = ssub.s32 1, %s3
  %s6 = scalar_select 0, %s5, %s3
  $region1: #{tpu_custom_call.1} parent=0
    #allocation3 [shape = 'u8[32768]{0}', space=vmem, size = 0x8000, scoped, tag = 'input window, operand 0']
    #allocation4 [shape = 's32[2]{0}', space=sflag, size = 0x8, scoped, tag = 'scoped memory for tpu_custom_call.1']
    #allocation5 [shape = 's32[2]{0}', space=sflag, size = 0x8, scoped, tag = 'scoped memory for tpu_custom_call.1']
    #allocation6 [shape = 'u8[32768]{0}', space=vmem, size = 0x8000, scoped, tag = 'input window, operand 1']
    #allocation7 [shape = 's32[2]{0}', space=sflag, size = 0x8, scoped, tag = 'scoped memory for tpu_custom_call.1']
    #allocation8 [shape = 'u8[32768]{0}', space=vmem, size = 0x8000, scoped, tag = 'output window, operand 0']
    %7 = vsyncpa [#allocation4], 0
    %s8 = scalar_lea.sflag [#allocation4], 1
    %9 = vsyncpa %s8, 0
    %10 = vsyncpa [#allocation7], 0
    %s11 = scalar_lea.sflag [#allocation7], 1
    %12 = vsyncpa %s11, 0
    %13 = vsyncpa [#allocation5], 0
    %s14 = scalar_lea.sflag [#allocation5], 1
    %15 = vsyncpa %s14, 0
    loop: start=0, step=1, limit=4
    $region2: #{tpu_custom_call.1} parent=1 // loop_pre_header
      _
    $region3: #{tpu_custom_call.1} parent=1 // loop_header
      %s17 = sphi 0, %s21
      %p18 = scmp.ge.s32.totalorder %s17, 4
      %s24 = sphi 0, %s36
      %s25 = sphi 0, %s32
      %s26 = sphi 0, %s24
      %s27 = sphi 0, %s25
      %s28 = sphi 0, %s26
      %s29 = sphi 0, %s27
      %s41 = sphi 0, %s43
      %s44 = sphi 0, %s41
      %s45 = sphi 0, %s44
      %s61 = sphi 0, %s45
      %s69 = sphi 0, %s71
      %s72 = sphi 0, %s69
      %s73 = sphi 0, %s72
      %s89 = sphi 0, %s73
      %s95 = sphi 0, %s97
      %s98 = sphi 0, %s95
      %s99 = sphi 0, %s98
      %s115 = sphi 0, %s99
    $region4: #{tpu_custom_call.1} parent=1 // loop_header_branch
      %20 = sbr.rel (%p18) target = $region8
    $region5: #{tpu_custom_call.1} parent=1 // loop_body
      %s22 = ssub.s32 %s17, 1
      %s23 = ssub.s32 %s17, 2
      %s30 = sadd.s32 1, %s25
      %p31 = scmp.ge.s32.totalorder %s30, 1
      %s32 = scalar_select %p31, 0, %s30
      %s33 = sadd.s32 1, %s24
      %s34 = scalar_select %p31, %s33, %s24
      %p35 = scmp.ge.s32.totalorder %s34, 2
      %s36 = scalar_select %p35, 0, %s34
      %s37 = sadd.s32 %s24, %s25
      %s38 = sadd.s32 %s36, %s32
      %s39 = ssub.s32 %s37, %s38
      %p40 = scmp.eq.s32.totalorder %s39, 0
      %s42 = sadd.s32 %s41, 1
      %s43 = scalar_select %p40, %s41, %s42
      %p46 = pneg %p40
      %p47 = scmp.eq.s32.totalorder %s17, 1
      %p48 = por %p46, %p47
      %p49 = scmp.ne.s32.totalorder %s41, %s44
      %p50 = scmp.eq.s32.totalorder %s17, 0
      %p51 = por %p49, %p50
      %p52 = scmp.ne.s32.totalorder %s41, %s44
      %p53 = scmp.eq.s32.totalorder %s22, 1
      %p54 = por %p52, %p53
      %p55 = scmp.ne.s32.totalorder %s44, %s45
      %p56 = scmp.eq.s32.totalorder %s22, 0
      %p57 = por %p55, %p56
      %p58 = scmp.ne.s32.totalorder %s44, %s45
      %p59 = scmp.eq.s32.totalorder %s23, 1
      %p60 = por %p58, %p59
      %p62 = scmp.ne.s32.totalorder %s45, %s61
      %p63 = scmp.eq.s32.totalorder %s23, 0
      %p64 = por %p62, %p63
      %s65 = sadd.s32 %s24, %s25
      %s66 = sadd.s32 %s36, %s32
      %s67 = ssub.s32 %s65, %s66
      %p68 = scmp.eq.s32.totalorder %s67, 0
      %s70 = sadd.s32 %s69, 1
      %s71 = scalar_select %p68, %s69, %s70
      %p74 = pneg %p68
      %p75 = scmp.eq.s32.totalorder %s17, 1
      %p76 = por %p74, %p75
      %p77 = scmp.ne.s32.totalorder %s69, %s72
      %p78 = scmp.eq.s32.totalorder %s17, 0
      %p79 = por %p77, %p78
      %p80 = scmp.ne.s32.totalorder %s69, %s72
      %p81 = scmp.eq.s32.totalorder %s22, 1
      %p82 = por %p80, %p81
      %p83 = scmp.ne.s32.totalorder %s72, %s73
      %p84 = scmp.eq.s32.totalorder %s22, 0
      %p85 = por %p83, %p84
      %p86 = scmp.ne.s32.totalorder %s72, %s73
      %p87 = scmp.eq.s32.totalorder %s23, 1
      %p88 = por %p86, %p87
      %p90 = scmp.ne.s32.totalorder %s73, %s89
      %p91 = scmp.eq.s32.totalorder %s23, 0
      %p92 = por %p90, %p91
      %s93 = ssub.s32 %s24, %s36
      %p94 = scmp.eq.s32.totalorder %s93, 0
      %s96 = sadd.s32 %s95, 1
      %s97 = scalar_select %p94, %s95, %s96
      %p100 = pneg %p94
      %p101 = scmp.eq.s32.totalorder %s17, 1
      %p102 = por %p100, %p101
      %p103 = scmp.ne.s32.totalorder %s95, %s98
      %p104 = scmp.eq.s32.totalorder %s17, 0
      %p105 = por %p103, %p104
      %p106 = scmp.ne.s32.totalorder %s95, %s98
      %p107 = scmp.eq.s32.totalorder %s22, 1
      %p108 = por %p106, %p107
      %p109 = scmp.ne.s32.totalorder %s98, %s99
      %p110 = scmp.eq.s32.totalorder %s22, 0
      %p111 = por %p109, %p110
      %p112 = scmp.ne.s32.totalorder %s98, %s99
      %p113 = scmp.eq.s32.totalorder %s23, 1
      %p114 = por %p112, %p113
      %p116 = scmp.ne.s32.totalorder %s99, %s115
      %p117 = scmp.eq.s32.totalorder %s23, 0
      %p118 = por %p116, %p117
      %p119 = scmp.le.s32.totalorder 1, %s17
      %p120 = scmp.lt.s32.totalorder %s17, 3
      %p121 = pnand %p119, %p120
      %p122 = pneg %p121
      // Predicated region
      $region9: #{tpu_custom_call.1} parent=5 // pred_check
        _
      $region10: #{tpu_custom_call.1} parent=5 // pred_check_branch
        %124 = sbr.rel (%p121) target = $region12
      $region11: #{tpu_custom_call.1} parent=5 // pred_region
        %s125 = ssub.s32 %s17, 1
      $region12: #{tpu_custom_call.1} parent=5 // pred_fallthru
        _
      %p126 = scmp.lt.s32.totalorder %s17, 2
      // Predicated region
      $region13: #{tpu_custom_call.1} parent=5 // pred_check
        %p127 = pneg %p126
      $region14: #{tpu_custom_call.1} parent=5 // pred_check_branch
        %129 = sbr.rel (%p127) target = $region16
      $region15: #{tpu_custom_call.1} parent=5 // pred_region
        // Predicated region
        $region17: #{tpu_custom_call.1} parent=15 // pred_check
          %p130 = pneg %p51
        $region18: #{tpu_custom_call.1} parent=15 // pred_check_branch
          %132 = sbr.rel (%p130) target = $region20
        $region19: #{tpu_custom_call.1} parent=15 // pred_region
          %s133 = sand.u32 %s41, 1
          %s134 = scalar_lea.sflag [#allocation4], %s133
          %s135 = sand.u32 %s41, 1
          %s136 = smul.addr %s135, 32
          %s137 = scalar_lea.vmem [#allocation3], %s136
          %s138 = sadd.s32 %s24, %s25
          %140 = vsyncadd %s134, 0
          %s141 = smul.addr %s138, 4
          %s142 = smul.addr %s141, 8
          %s143 = scalar_lea.hbm %s0, %s142
          %s145 = sshll.u32 %s143, 4
          %s146 = int_to_ptr.hbm [resolvable:$true] %s145
          %s147 = sshll.u32 %s137, 4
          %s148 = int_to_ptr.vmem [resolvable:$true] %s147
          %150 = dma.hbm_to_vmem [thread:$0]  %s146, 512, %s148, %s134
        $region20: #{tpu_custom_call.1} parent=15 // pred_fallthru
          _
        // Predicated region
        $region21: #{tpu_custom_call.1} parent=15 // pred_check
          %p151 = pneg %p79
        $region22: #{tpu_custom_call.1} parent=15 // pred_check_branch
          %153 = sbr.rel (%p151) target = $region24
        $region23: #{tpu_custom_call.1} parent=15 // pred_region
          %s154 = sand.u32 %s69, 1
          %s155 = scalar_lea.sflag [#allocation7], %s154
          %s156 = sand.u32 %s69, 1
          %s157 = smul.addr %s156, 32
          %s158 = scalar_lea.vmem [#allocation6], %s157
          %s159 = sadd.s32 %s24, %s25
          %161 = vsyncadd %s155, 0
          %s162 = smul.addr %s159, 4
          %s163 = smul.addr %s162, 8
          %s164 = scalar_lea.hbm %s1, %s163
          %s166 = sshll.u32 %s164, 4
          %s167 = int_to_ptr.hbm [resolvable:$true] %s166
          %s168 = sshll.u32 %s158, 4
          %s169 = int_to_ptr.vmem [resolvable:$true] %s168
          %171 = dma.hbm_to_vmem [thread:$0]  %s167, 512, %s169, %s155
        $region24: #{tpu_custom_call.1} parent=15 // pred_fallthru
          _
      $region16: #{tpu_custom_call.1} parent=5 // pred_fallthru
        _
      %p172 = scmp.le.s32.totalorder 1, %s17
      %p173 = scmp.lt.s32.totalorder %s17, 3
      %p174 = pnand %p172, %p173
      %p175 = pneg %p174
      // Predicated region
      $region25: #{tpu_custom_call.1} parent=5 // pred_check
        _
      $region26: #{tpu_custom_call.1} parent=5 // pred_check_branch
        %177 = sbr.rel (%p174) target = $region28
      $region27: #{tpu_custom_call.1} parent=5 // pred_region
        %s178 = ssub.s32 %s17, 1
        %s179 = sand.u32 %s44, 1
        %s180 = scalar_lea.sflag [#allocation4], %s179
        %s181 = sand.u32 %s44, 1
        %s182 = smul.addr %s181, 32
        %s183 = scalar_lea.vmem [#allocation3], %s182
        // Predicated region
        $region29: #{tpu_custom_call.1} parent=27 // pred_check
          %p184 = pneg %p57
        $region30: #{tpu_custom_call.1} parent=27 // pred_check_branch
          %186 = sbr.rel (%p184) target = $region32
        $region31: #{tpu_custom_call.1} parent=27 // pred_region
          %188 = dma.done %s180, 512
        $region32: #{tpu_custom_call.1} parent=27 // pred_fallthru
          _
        %s189 = sand.u32 %s72, 1
        %s190 = scalar_lea.sflag [#allocation7], %s189
        %s191 = sand.u32 %s72, 1
        %s192 = smul.addr %s191, 32
        %s193 = scalar_lea.vmem [#allocation6], %s192
        // Predicated region
        $region33: #{tpu_custom_call.1} parent=27 // pred_check
          %p194 = pneg %p85
        $region34: #{tpu_custom_call.1} parent=27 // pred_check_branch
          %196 = sbr.rel (%p194) target = $region36
        $region35: #{tpu_custom_call.1} parent=27 // pred_region
          %198 = dma.done %s190, 512
        $region36: #{tpu_custom_call.1} parent=27 // pred_fallthru
          _
        %s199 = sand.u32 %s44, 1
        %s200 = scalar_lea.sflag [#allocation4], %s199
        %s201 = sand.u32 %s44, 1
        %s202 = smul.addr %s201, 32
        %s203 = scalar_lea.vmem [#allocation3], %s202
        %p204 = pneg %p57
        %p205 = pneg %p54
        %s206 = sand.u32 %s72, 1
        %s207 = scalar_lea.sflag [#allocation7], %s206
        %s208 = sand.u32 %s72, 1
        %s209 = smul.addr %s208, 32
        %s210 = scalar_lea.vmem [#allocation6], %s209
        %p211 = pneg %p85
        %p212 = pneg %p82
        %p213 = pneg %p111
        %p214 = pneg %p108
        %s215 = sand.u32 %s98, 1
        %s216 = scalar_lea.sflag [#allocation5], %s215
        %s217 = sand.u32 %s98, 1
        %s218 = smul.addr %s217, 32
        %s219 = scalar_lea.vmem [#allocation8], %s218
        %s220 = sadd.s32 %s26, %s27
        %s221 = sadd.s32 %s26, %s27
        %p222 = scmp.eq.s32.totalorder %s27, 0
        // Predicated region
        $region37: #{tpu_custom_call.1} parent=27 // pred_check
          %p223 = pneg %p222
        $region38: #{tpu_custom_call.1} parent=27 // pred_check_branch
          %225 = sbr.rel (%p223) target = $region40
        $region39: #{tpu_custom_call.1} parent=27 // pred_region
          %226 = vst [vmem:[#allocation2] sm:$0xff] 0.0
          %227 = vst [vmem:[#allocation2 + $0x8] sm:$0xff] 0.0
          %228 = vst [vmem:[#allocation2 + $0x10] sm:$0xff] 0.0
          %229 = vst [vmem:[#allocation2 + $0x18] sm:$0xff] 0.0
        $region40: #{tpu_custom_call.1} parent=27 // pred_fallthru
          _
        %v230 = vld [vmem:[%s183] sm:$0xff]
        %v231 = vld [vmem:[%s183 + $0x8] sm:$0xff]
        %v232 = vld [vmem:[%s183 + $0x10] sm:$0xff]
        %v233 = vld [vmem:[%s183 + $0x18] sm:$0xff]
        %v234 = vmul.f32 %v230, 0.75
        %v235 = vmul.f32 %v231, 0.75
        %v236 = vmul.f32 %v232, 0.75
        %v237 = vmul.f32 %v233, 0.75
        %v238 = vld [vmem:[%s193] sm:$0xff]
        %v239 = vld [vmem:[%s193 + $0x8] sm:$0xff]
        %v240 = vld [vmem:[%s193 + $0x10] sm:$0xff]
        %v241 = vld [vmem:[%s193 + $0x18] sm:$0xff]
        %v242 = vsub.f32 %v234, %v238
        %v243 = vsub.f32 %v235, %v239
        %v244 = vsub.f32 %v236, %v240
        %v245 = vsub.f32 %v237, %v241
        %v246 = vmul.f32 %v242, %v242
        %v247 = vmul.f32 %v243, %v243
        %v248 = vmul.f32 %v244, %v244
        %v249 = vmul.f32 %v245, %v245
        %v250 = vld [vmem:[#allocation2] sm:$0xff]
        %v251 = vld [vmem:[#allocation2 + $0x8] sm:$0xff]
        %v252 = vld [vmem:[#allocation2 + $0x10] sm:$0xff]
        %v253 = vld [vmem:[#allocation2 + $0x18] sm:$0xff]
        %v254 = vadd.f32 %v246, 0.0
        %v255 = vadd.f32 %v247, 0.0
        %v256 = vadd.f32 %v248, 0.0
        %v257 = vadd.f32 %v249, 0.0
        %v258 = vadd.f32 %v250, %v254
        %v259 = vadd.f32 %v251, %v255
        %v260 = vadd.f32 %v252, %v256
        %v261 = vadd.f32 %v253, %v257
        %262 = vst [vmem:[#allocation2] sm:$0xff] %v258
        %263 = vst [vmem:[#allocation2 + $0x8] sm:$0xff] %v259
        %264 = vst [vmem:[#allocation2 + $0x10] sm:$0xff] %v260
        %265 = vst [vmem:[#allocation2 + $0x18] sm:$0xff] %v261
        // Predicated region
        $region41: #{tpu_custom_call.1} parent=27 // pred_check
          %p266 = pneg %p222
        $region42: #{tpu_custom_call.1} parent=27 // pred_check_branch
          %268 = sbr.rel (%p266) target = $region44
        $region43: #{tpu_custom_call.1} parent=27 // pred_region
          %v269 = vld [vmem:[#allocation2] sm:$0xff]
          %v270 = vld [vmem:[#allocation2 + $0x8] sm:$0xff]
          %v271 = vld [vmem:[#allocation2 + $0x10] sm:$0xff]
          %v272 = vld [vmem:[#allocation2 + $0x18] sm:$0xff]
          %273 = vst [vmem:[%s219] sm:$0xff] %v269
          %274 = vst [vmem:[%s219 + $0x8] sm:$0xff] %v270
          %275 = vst [vmem:[%s219 + $0x10] sm:$0xff] %v271
          %276 = vst [vmem:[%s219 + $0x18] sm:$0xff] %v272
        $region44: #{tpu_custom_call.1} parent=27 // pred_fallthru
          _
        %s277 = sand.u32 %s98, 1
        %s278 = scalar_lea.sflag [#allocation5], %s277
        %s279 = sand.u32 %s98, 1
        %s280 = smul.addr %s279, 32
        %s281 = scalar_lea.vmem [#allocation8], %s280
        // Predicated region
        $region45: #{tpu_custom_call.1} parent=27 // pred_check
          %p282 = pneg %p108
        $region46: #{tpu_custom_call.1} parent=27 // pred_check_branch
          %284 = sbr.rel (%p282) target = $region48
        $region47: #{tpu_custom_call.1} parent=27 // pred_region
          %286 = vsyncadd %s278, 0
          %s287 = smul.addr %s26, 4
          %s288 = smul.addr %s287, 8
          %s289 = scalar_lea.hbm %s2, %s288
          %s291 = sshll.u32 %s281, 4
          %s292 = int_to_ptr.vmem [resolvable:$true] %s291
          %s293 = sshll.u32 %s289, 4
          %s294 = int_to_ptr.hbm [resolvable:$true] %s293
          %296 = dma.vmem_to_hbm [thread:$0]  %s292, 512, %s294, %s278
        $region48: #{tpu_custom_call.1} parent=27 // pred_fallthru
          _
      $region28: #{tpu_custom_call.1} parent=5 // pred_fallthru
        _
      %p297 = scmp.le.s32.totalorder 2, %s17
      // Predicated region
      $region49: #{tpu_custom_call.1} parent=5 // pred_check
        %p298 = pneg %p297
      $region50: #{tpu_custom_call.1} parent=5 // pred_check_branch
        %300 = sbr.rel (%p298) target = $region52
      $region51: #{tpu_custom_call.1} parent=5 // pred_region
        %s301 = ssub.s32 %s17, 2
        // Predicated region
        $region53: #{tpu_custom_call.1} parent=51 // pred_check
          %p302 = pneg %p114
        $region54: #{tpu_custom_call.1} parent=51 // pred_check_branch
          %304 = sbr.rel (%p302) target = $region56
        $region55: #{tpu_custom_call.1} parent=51 // pred_region
          %s305 = sand.u32 %s99, 1
          %s306 = scalar_lea.sflag [#allocation5], %s305
          %s307 = sand.u32 %s99, 1
          %s308 = smul.addr %s307, 32
          %s309 = scalar_lea.vmem [#allocation8], %s308
          %311 = dma.done %s306, 512
        $region56: #{tpu_custom_call.1} parent=51 // pred_fallthru
          _
      $region52: #{tpu_custom_call.1} parent=5 // pred_fallthru
        _
    $region6: #{tpu_custom_call.1} parent=1 // loop_footer
      %s21 = sadd.s32 1, %s17
    $region7: #{tpu_custom_call.1} parent=1 // loop_footer_branch
      %16 = sbr.rel target = $region3
    $region8: #{tpu_custom_call.1} parent=1 // loop_exit
      _
    %312 = vsyncpa [#allocation4], 1
    %s313 = scalar_lea.sflag [#allocation4], 1
    %314 = vsyncpa %s313, 1
    %315 = vsyncpa [#allocation7], 1
    %s316 = scalar_lea.sflag [#allocation7], 1
    %317 = vsyncpa %s316, 1
    %318 = vsyncpa [#allocation5], 1
    %s319 = scalar_lea.sflag [#allocation5], 1
    %320 = vsyncpa %s319, 1

</llo_original>
